<compile_context>
chip_gen: v7x
topology: tpu7x:2x2x1
jax: 0.10.0
libtpu: 0.0.40
codegen_flags: <defaults>
</compile_context>

<pallas_src>
import functools
import math

import jax
import jax.numpy as jnp
from jax.experimental import pallas as pl
from jax.experimental.pallas import tpu as pltpu


def _round_up(a, m):
    return ((a + m - 1) // m) * m


def _vmem_capacity_bytes():
    """Physical per-core VMEM (v5e/v6e: 128 MiB, v7x: 64 MiB); conservative fallback."""
    try:
        cap = int(pltpu.get_tpu_info().vmem_capacity_bytes)
        if cap > 0:
            return cap
    except Exception:
        pass
    return 64 << 20


def _lconv_kernel(x_ref, w_ref, *rest, K, T, Tp, use_masks, has_bias):
    # x_ref : (tr, Tp)  input rows (flattened (batch, channel) on the sublane axis)
    # w_ref : (tr, K)   per-row kernel taps
    # b_ref : (tr, 1)   per-row f32 bias (only when has_bias)
    # o_ref : (tr, Tp)  output rows
    if has_bias:
        b_ref, o_ref = rest
    else:
        (o_ref,) = rest

    P = (K - 1) // 2
    x = x_ref[...].astype(jnp.float32)           # cast once (no-op for f32 inputs)
    w = w_ref[...].astype(jnp.float32)           # (tr, K) -- all taps loaded once

    acc = x * w[:, P:P + 1]                      # center tap (no shift)
    if has_bias:
        acc = acc + b_ref[...]                   # bias folded into the first term

    if use_masks:
        # Hoisted lane-index row; used to zero taps that would read across the
        # original-T boundary (only needed when the trailing lane padding < P).
        t_idx = jax.lax.broadcasted_iota(jnp.int32, (1, Tp), 1)

    for k in range(K):                           # K is tiny & static -> fully unrolled
        if k == P:
            continue
        s = k - P                                # data lookahead of this tap
        # tap[t] = x[t + s] via a lane rotation (jnp.roll semantics, shift >= 0).
        # When use_masks is False the wrapped lanes land in the zero trailing padding
        # (left taps) or in the discarded t >= T region (right taps).
        tap = pltpu.roll(x, (-s) % Tp, axis=1)
        if use_masks:
            if s < 0:
                tap = jnp.where(t_idx >= -s, tap, 0.0)       # left edge
            else:
                tap = jnp.where(t_idx < T - s, tap, 0.0)     # right edge (original T)
        acc = acc + tap * w[:, k:k + 1]

    o_ref[...] = acc.astype(o_ref.dtype)


def lightweight_conv1d(x, weight, bias=None, *, padding=0, num_heads=1,
                       weight_softmax=False):
    """x: (B, C, T), weight: (H, 1, K), bias: (C,) or None -> (B, C, T)."""
    B, C, T = x.shape
    H = num_heads
    K = weight.shape[-1]
    P = padding
    assert (B * C) % H == 0
    assert 2 * padding == K - 1, \
        "output .view(B, C, T) requires 2*padding == kernel_size - 1"

    # ---- tiny parameter prep (plain JAX) ----
    w = weight
    if weight_softmax:
        w = jax.nn.softmax(w, axis=-1)
    # weight_dropout: FairseqDropout is identity in eval mode -> no-op here.
    w = w[:, 0, :].astype(jnp.float32)                       # (H, K)
    has_bias = bias is not None

    # ---- flatten (B, C) -> rows; head(row) = row % H uniformly ----
    R = B * C
    in_item = jnp.dtype(x.dtype).itemsize
    out_item = in_item

    # ---- time axis: lane-dense (multiple of 128).  If the lane padding also gives
    #      >= P trailing zero lanes, the rolled taps need no edge masks at all. ----
    Tp = _round_up(T, 128)
    if Tp - T < P:
        Tp_alt = _round_up(T + P, 128)
        if (Tp_alt - Tp) * 16 <= Tp_alt:         # widen only if the extra HBM is <= ~6%
            Tp = Tp_alt
    use_masks = (Tp - T) < P

    # ---- row axis: multiple of 8 (sublane constraint) ----
    Rp = _round_up(R, 8)

    # ---- generation-aware tile sizing ----
    vmem_cap = _vmem_capacity_bytes()
    vmem_limit = int(min((vmem_cap * 3) // 4, 100 << 20))    # v7x ~48 MiB, v5e/v6e ~96 MiB
    # double-buffered in+out blocks plus ~4 block-sized f32 temps must fit comfortably
    per_row_bytes = Tp * (2 * (in_item + out_item) + 4 * 4)
    rows_budget = max(8, int(0.9 * vmem_limit) // per_row_bytes)
    rows_budget = min(rows_budget, max(8, (8 << 20) // (Tp * in_item)))   # <= ~8 MiB x-block

    # shared weight slab: if the row tile is a multiple of lcm(8, H), every tile sees the
    # identical head pattern -> one (tr, K) slab (constant index_map) stays VMEM-resident.
    L = (8 * H) // math.gcd(8, H)
    shared_w = (Rp % L == 0) and (L <= rows_budget)
    unit = L if shared_w else 8
    tr = min(Rp, max(unit, (rows_budget // unit) * unit))
    # keep the grid splittable across v7x's two TensorCores when it costs ~nothing
    if tr >= Rp and Rp >= 2 * unit:
        tr = _round_up(Rp // 2, unit)
    nr = pl.cdiv(Rp, tr)

    # ---- operand slabs ----
    x2 = x.reshape(R, T)
    if Rp != R or Tp != T:
        x2 = jnp.pad(x2, ((0, Rp - R), (0, Tp - T)))         # zeros: also feed the halo

    if shared_w:
        w_rows = w[jnp.arange(tr) % H]                       # (tr, K) shared by all tiles
        w_map = lambda ri: (0, 0)
    else:
        w_rows = w[jnp.arange(Rp) % H]                       # (Rp, K) per-row fallback
        w_map = lambda ri: (ri, 0)

    in_specs = [
        pl.BlockSpec((tr, Tp), lambda ri: (ri, 0)),          # x rows
        pl.BlockSpec((tr, K), w_map),                        # kernel taps
    ]
    args = [x2, w_rows]
    if has_bias:
        b_rows = bias.astype(jnp.float32)[jnp.arange(Rp) % C].reshape(Rp, 1)
        in_specs.append(pl.BlockSpec((tr, 1), lambda ri: (ri, 0)))
        args.append(b_rows)

    cost = pl.CostEstimate(
        flops=int(2 * R * T * K),
        transcendentals=0,
        bytes_accessed=int(Rp * Tp * (in_item + out_item)
                           + w_rows.size * 4 + (Rp * 4 if has_bias else 0)),
    )

    kernel = functools.partial(_lconv_kernel, K=K, T=T, Tp=Tp,
                               use_masks=use_masks, has_bias=has_bias)

    out = pl.pallas_call(
        kernel,
        out_shape=jax.ShapeDtypeStruct((Rp, Tp), x.dtype),
        grid=(nr,),
        in_specs=in_specs,
        out_specs=pl.BlockSpec((tr, Tp), lambda ri: (ri, 0)),
        compiler_params=pltpu.CompilerParams(
            dimension_semantics=("parallel",),
            vmem_limit_bytes=vmem_limit),
        cost_estimate=cost,
    )(*args)

    return out[:R, :T].reshape(B, C, T)


def _reference(x, weight, bias, *, padding, num_heads, weight_softmax):
    """Plain-JAX reference mirroring the PyTorch forward, for verification."""
    B, C, T = x.shape
    H = num_heads
    K = weight.shape[-1]
    w = jax.nn.softmax(weight, axis=-1) if weight_softmax else weight
    w = w[:, 0, :]
    head_idx = (jnp.arange(B)[:, None] * C + jnp.arange(C)[None, :]) % H
    w_bc = w[head_idx]                                       # (B, C, K)
    xp = jnp.pad(x, ((0, 0), (0, 0), (padding, padding)))
    out = jnp.zeros((B, C, T), jnp.float32)
    for k in range(K):
        out = out + xp[:, :, k:k + T] * w_bc[:, :, k:k + 1]
    if bias is not None:
        out = out + bias.reshape(1, C, 1)
    return out.astype(x.dtype)


if __name__ == "__main__":
    def run_case(key, B, C, T, H, K, weight_softmax, use_bias):
        padding = (K - 1) // 2
        kx, kw, kb = jax.random.split(key, 3)
        x = jax.random.normal(kx, (B, C, T), dtype=jnp.float32)
        # xavier_uniform_ with gain('linear') = 1.0 on shape (H, 1, K)
        bound = (6.0 / (K + H * K)) ** 0.5
        weight = jax.random.uniform(kw, (H, 1, K), jnp.float32, -bound, bound)
        bias = (0.1 * jax.random.normal(kb, (C,), jnp.float32)) if use_bias else None

        out = lightweight_conv1d(x, weight, bias, padding=padding, num_heads=H,
                                 weight_softmax=weight_softmax)
        out = jax.block_until_ready(out)
        ref = _reference(x, weight, bias, padding=padding, num_heads=H,
                         weight_softmax=weight_softmax)
        assert out.shape == (B, C, T)
        assert jnp.allclose(out, ref, atol=1e-5, rtol=1e-5), \
            f"mismatch for case B={B} C={C} T={T} H={H} K={K}"

    key = jax.random.PRNGKey(0)
    k1, k2, k3, k4 = jax.random.split(key, 4)
    # small demo shapes consistent with the module (B x C x T)
    # mask-free halo path (trailing lane padding absorbs the conv halo):
    run_case(k1, B=2, C=4, T=16, H=2, K=3, weight_softmax=True, use_bias=True)
    # T already lane-dense -> masked-edge path, shared weight slab, 2 grid blocks:
    run_case(k2, B=2, C=16, T=128, H=4, K=5, weight_softmax=False, use_bias=False)
    # general (B*C) % H == 0 head indexing with C % H != 0, padded row axis:
    run_case(k3, B=2, C=6, T=32, H=4, K=3, weight_softmax=True, use_bias=True)
    # per-row weight-slab fallback (row padding not a multiple of lcm(8, H)):
    run_case(k4, B=1, C=9, T=40, H=3, K=3, weight_softmax=True, use_bias=True)

    print("KERNEL_OK")
</pallas_src>

<mosaic_0001>
module attributes {stable_mosaic.version = 11 : i64} {
  func.func @_lconv_kernel(%arg0: i32, %arg1: memref<8x128xf32, #tpu.memory_space<vmem>>, %arg2: memref<8x3xf32, #tpu.memory_space<vmem>>, %arg3: memref<8x1xf32, #tpu.memory_space<vmem>>, %arg4: memref<8x128xf32, #tpu.memory_space<vmem>>) attributes {dimension_semantics = [#tpu.dimension_semantics<parallel>], iteration_bounds = array<i64: 1>, scalar_prefetch = 0 : i64, scratch_operands = 0 : i64, tpu.core_type = #tpu.core_type<tc>, window_params = [{transform_indices = @transform_0, window_bounds = array<i64: 8, 128>}, {pipeline_mode = #tpu.pipeline_mode<synchronous>, transform_indices = @transform_1, window_bounds = array<i64: 8, 3>}, {transform_indices = @transform_2, window_bounds = array<i64: 8, 1>}, {transform_indices = @transform_3, window_bounds = array<i64: 8, 128>}]} {
    %c0 = arith.constant 0 : index
    %c0_0 = arith.constant 0 : index
    %0 = vector.load %arg1[%c0, %c0_0] : memref<8x128xf32, #tpu.memory_space<vmem>>, vector<8x128xf32>
    %c0_1 = arith.constant 0 : index
    %c0_2 = arith.constant 0 : index
    %1 = vector.load %arg2[%c0_1, %c0_2] : memref<8x3xf32, #tpu.memory_space<vmem>>, vector<8x3xf32>
    %2 = vector.extract_strided_slice %1 {offsets = [0, 1], sizes = [8, 1], strides = [1, 1]} : vector<8x3xf32> to vector<8x1xf32>
    %3 = vector.broadcast %2 : vector<8x1xf32> to vector<8x128xf32>
    %4 = arith.mulf %0, %3 : vector<8x128xf32>
    %c0_3 = arith.constant 0 : index
    %c0_4 = arith.constant 0 : index
    %5 = vector.load %arg3[%c0_3, %c0_4] : memref<8x1xf32, #tpu.memory_space<vmem>>, vector<8x1xf32>
    %6 = vector.broadcast %5 : vector<8x1xf32> to vector<8x128xf32>
    %7 = arith.addf %4, %6 : vector<8x128xf32>
    %c1_i32 = arith.constant 1 : i32
    %8 = tpu.dynamic_rotate %0 by %c1_i32 dim 1 : vector<8x128xf32>, i32 -> vector<8x128xf32>
    %9 = vector.extract_strided_slice %1 {offsets = [0, 0], sizes = [8, 1], strides = [1, 1]} : vector<8x3xf32> to vector<8x1xf32>
    %10 = vector.broadcast %9 : vector<8x1xf32> to vector<8x128xf32>
    %11 = arith.mulf %8, %10 : vector<8x128xf32>
    %12 = arith.addf %7, %11 : vector<8x128xf32>
    %c127_i32 = arith.constant 127 : i32
    %13 = tpu.dynamic_rotate %0 by %c127_i32 dim 1 : vector<8x128xf32>, i32 -> vector<8x128xf32>
    %14 = vector.extract_strided_slice %1 {offsets = [0, 2], sizes = [8, 1], strides = [1, 1]} : vector<8x3xf32> to vector<8x1xf32>
    %15 = vector.broadcast %14 : vector<8x1xf32> to vector<8x128xf32>
    %16 = arith.mulf %13, %15 : vector<8x128xf32>
    %17 = arith.addf %12, %16 : vector<8x128xf32>
    %c0_5 = arith.constant 0 : index
    %c0_6 = arith.constant 0 : index
    %18 = vector.load %arg4[%c0_5, %c0_6] : memref<8x128xf32, #tpu.memory_space<vmem>>, vector<8x128xf32>
    tpu.vector_store %arg4[%c0_5, %c0_6], %17 {strides = array<i32>} : memref<8x128xf32, #tpu.memory_space<vmem>>, vector<8x128xf32>,
    return
  }
  func.func @transform_0(%arg0: i32) -> (i32, i32) {
    %c0_i32 = arith.constant 0 : i32
    %c0_i32_0 = arith.constant 0 : i32
    return %arg0, %c0_i32 : i32, i32
  }
  func.func @transform_1(%arg0: i32) -> (i32, i32) {
    %c0_i32 = arith.constant 0 : i32
    %c0_i32_0 = arith.constant 0 : i32
    %c0_i32_1 = arith.constant 0 : i32
    return %c0_i32, %c0_i32_0 : i32, i32
  }
  func.func @transform_2(%arg0: i32) -> (i32, i32) {
    %c0_i32 = arith.constant 0 : i32
    %c0_i32_0 = arith.constant 0 : i32
    return %arg0, %c0_i32 : i32, i32
  }
  func.func @transform_3(%arg0: i32) -> (i32, i32) {
    %c0_i32 = arith.constant 0 : i32
    %c0_i32_0 = arith.constant 0 : i32
    return %arg0, %c0_i32 : i32, i32
  }
}

</mosaic_0001>

<llo_original>
// kernel: tpu_custom_call.1
$region0: #{tpu_custom_call.1}
  #allocation0 [shape = 'u32[]', space=smem, size = 0x4, offset = 0x4, fixed_abs, tag = 'smem constant byte address 0x4 - core index']
  #allocation1 [shape = 'u32[144,128]{1,0:T(1,128)}', space=vmem, size = 0x12000, scoped, tag = 'internal scratch']
  %s0 = inlined_call_operand.vmem [shape: f32[8,128], index: 0, kind: input, shape index: {}]
  %s1 = inlined_call_operand.vmem [shape: f32[8,3], index: 1, kind: input, shape index: {}]
  %s2 = inlined_call_operand.vmem [shape: f32[8,1], index: 2, kind: input, shape index: {}]
  %s3 = inlined_call_operand.hbm [shape: f32[8,128], index: 3, kind: output, shape index: {}]
  %s4 = sld [smem:[#allocation0]]
  $region22: #{tpu_custom_call.1} parent=0
    _
  %s6 = ssub.s32 1, %s4
  %s7 = scalar_select 0, %s6, %s4
  $region1: #{tpu_custom_call.1} parent=0
    #allocation2 [shape = 'u8[4096]{0}', space=vmem, size = 0x1000, scoped, tag = 'output window, operand 0, single buffered']
    #allocation3 [shape = 's32[1]{0}', space=sflag, size = 0x4, scoped, tag = 'scoped memory for tpu_custom_call.1']
    %8 = vsyncpa [#allocation3], 0
    // Predicated region
    $region2: #{tpu_custom_call.1} parent=1 // pred_check
      _
    $region3: #{tpu_custom_call.1} parent=1 // pred_check_branch
      %10 = sbr.rel (0) target = $region5
    $region4: #{tpu_custom_call.1} parent=1 // pred_region
      _
    $region5: #{tpu_custom_call.1} parent=1 // pred_fallthru
      _
    // Predicated region
    $region6: #{tpu_custom_call.1} parent=1 // pred_check
      _
    $region7: #{tpu_custom_call.1} parent=1 // pred_check_branch
      %12 = sbr.rel (0) target = $region9
    $region8: #{tpu_custom_call.1} parent=1 // pred_region
      _
    $region9: #{tpu_custom_call.1} parent=1 // pred_fallthru
      _
    // Predicated region
    $region10: #{tpu_custom_call.1} parent=1 // pred_check
      _
    $region11: #{tpu_custom_call.1} parent=1 // pred_check_branch
      %14 = sbr.rel (0) target = $region13
    $region12: #{tpu_custom_call.1} parent=1 // pred_region
      _
    $region13: #{tpu_custom_call.1} parent=1 // pred_fallthru
      _
    %v15 = vld [vmem:[%s0] sm:$0xff]
    %v16 = vld [vmem:[%s1] sm:$0xff]
    %18 = vset.pattern.permute.xlu0 1
    %19 = vperm.xlu0 %18, %v16
    %v20 = vpop.permute.xlu0 %19
    %v22 = vmul.f32 %v15, %v20
    %v23 = vld [vmem:[%s2] sm:$0xff]
    %25 = vset.pattern.permute.xlu0 0
    %26 = vperm.xlu0 %25, %v23
    %v27 = vpop.permute.xlu0 %26
    %v29 = vadd.f32 %v22, %v27
    %30 = vrot.lane.b32.xlu0 %v15, 1
    %v31 = vpop.permute.xlu0 %30
    %32 = vset.pattern.permute.xlu0 0
    %33 = vperm.xlu0 %32, %v16
    %v34 = vpop.permute.xlu0 %33
    %v36 = vmul.f32 %v31, %v34
    %v37 = vadd.f32 %v29, %v36
    %38 = vrot.lane.b32.xlu0 %v15, 127
    %v39 = vpop.permute.xlu0 %38
    %40 = vset.pattern.permute.xlu0 2
    %41 = vperm.xlu0 %40, %v16
    %v42 = vpop.permute.xlu0 %41
    %v44 = vmul.f32 %v39, %v42
    %v45 = vadd.f32 %v37, %v44
    %46 = vst [vmem:[#allocation2] sm:$0xff] %v45
    // Predicated region
    $region14: #{tpu_custom_call.1} parent=1 // pred_check
      _
    $region15: #{tpu_custom_call.1} parent=1 // pred_check_branch
      %48 = sbr.rel (0) target = $region17
    $region16: #{tpu_custom_call.1} parent=1 // pred_region
      %s50 = ssub.s32 128, 128
      %51 = vsyncadd [#allocation3], %s50
      %s53 = sshll.u32 [#allocation2], 4
      %s54 = int_to_ptr.vmem [resolvable:$true] %s53
      %56 = dma.vmem_to_hbm [thread:$0]  %s54, 128, %s3, [#allocation3]
    $region17: #{tpu_custom_call.1} parent=1 // pred_fallthru
      _
    // Predicated region
    $region18: #{tpu_custom_call.1} parent=1 // pred_check
      _
    $region19: #{tpu_custom_call.1} parent=1 // pred_check_branch
      %58 = sbr.rel (0) target = $region21
    $region20: #{tpu_custom_call.1} parent=1 // pred_region
      %59 = dma.done [#allocation3], 128
    $region21: #{tpu_custom_call.1} parent=1 // pred_fallthru
      _
    %60 = vsyncpa [#allocation3], 1

</llo_original>
